<compile_context>
chip_gen: v6e
topology: v6e:2x2x1
jax: 0.10.0
libtpu: 0.0.40
codegen_flags: <defaults>
</compile_context>

<pallas_src>
import functools
import math

import numpy as np
import jax
import jax.numpy as jnp
from jax import lax
from jax.experimental import pallas as pl
from jax.experimental.pallas import tpu as pltpu


ROW_TILE = 1024          # fat row tiles for purely row-parallel kernels
SEG_ROW_TILE = 512       # row tile for the scatter-add kernels
SEG_TILE = 512           # segment band width for the scatter-add kernels
HEAD_PAD = 8             # per-target heads padded from 1 -> 8 lanes
INV_SQRT2 = 1.0 / math.sqrt(2.0)
INV_SQRT3 = 1.0 / math.sqrt(3.0)


def _round_up(x, m):
    return ((x + m - 1) // m) * m


def _row_plan(m, tile=ROW_TILE):
    mp = _round_up(max(int(m), 1), 8)
    if mp <= tile:
        return mp, mp
    mp = _round_up(int(m), tile)
    return mp, tile


def _pad_rows(x, mp, value=0):
    m = x.shape[0]
    if m == mp:
        return x
    pad = [(0, mp - m)] + [(0, 0)] * (x.ndim - 1)
    return jnp.pad(x, pad, constant_values=value)


def _silu(x):
    return x * jax.nn.sigmoid(x)


def _dot(a, b):
    """MXU matmul: bf16 operands, f32 accumulation."""
    return jnp.dot(a.astype(jnp.bfloat16), b.astype(jnp.bfloat16),
                   preferred_element_type=jnp.float32)


def _row_map(i):
    return (i, 0)


def _zero_map2(i):
    return (0, 0)


def _zero_map3(i):
    return (0, 0, 0)


# ----------------------------------------------------------------------------
# Generic row-parallel launcher
# ----------------------------------------------------------------------------
def _rowwise(kernel, row_arrays, bcast_arrays, out_width):
    """Grid over fat row tiles.  Kernel signature: (row_refs..., bcast_refs..., out_ref)."""
    M = row_arrays[0].shape[0]
    Mp, tm = _row_plan(M)
    ins, specs = [], []
    for a in row_arrays:
        a = _pad_rows(jnp.asarray(a, jnp.float32), Mp)
        ins.append(a)
        specs.append(pl.BlockSpec((tm, a.shape[1]), _row_map))
    for a in bcast_arrays:
        a = jnp.asarray(a, jnp.float32)
        ins.append(a)
        specs.append(pl.BlockSpec(a.shape, _zero_map2 if a.ndim == 2 else _zero_map3))
    out = pl.pallas_call(
        kernel,
        out_shape=jax.ShapeDtypeStruct((Mp, out_width), jnp.float32),
        grid=(Mp // tm,),
        in_specs=specs,
        out_specs=pl.BlockSpec((tm, out_width), _row_map),
        compiler_params=pltpu.CompilerParams(dimension_semantics=("parallel",)),
    )(*ins)
    return out if Mp == M else out[:M]


# ----------------------------------------------------------------------------
# Kernels
# ----------------------------------------------------------------------------
def _dense_kernel(x_ref, w_ref, b_ref, o_ref, *, act):
    y = _dot(x_ref[...], w_ref[...]) + b_ref[...]
    if act == "silu":
        y = _silu(y)
    o_ref[...] = y


def _dense2_scale_kernel(x_ref, s_ref, w1_ref, b1_ref, w2_ref, b2_ref, o_ref, *,
                         act1, act2):
    y = _dot(x_ref[...], w1_ref[...]) + b1_ref[...]
    if act1 == "silu":
        y = _silu(y)
    y = y * s_ref[...]
    y = _dot(y, w2_ref[...]) + b2_ref[...]
    if act2 == "silu":
        y = _silu(y)
    o_ref[...] = y


def _edge_emb_kernel(hs_ref, ht_ref, rp_ref, ws_ref, wt_ref, b_ref, o_ref):
    # rp_ref already carries rbf @ W_edge_rbf (folded into the packed projection)
    y = _dot(hs_ref[...], ws_ref[...]) + _dot(ht_ref[...], wt_ref[...])
    y = y + rp_ref[...] + b_ref[...]
    o_ref[...] = _silu(y)


def _res_apply(x, w1_ref, b1_ref, w2_ref, b2_ref, n_layers):
    for l in range(n_layers):
        y = _dot(x, w1_ref[l]) + b1_ref[l]
        y = _silu(y)
        y = _dot(y, w2_ref[l]) + b2_ref[l]
        y = _silu(y)
        x = (x + y) * INV_SQRT2
    return x


def _res_head_kernel(*args, n_layers, has_scale):
    if has_scale:
        x_ref, s_ref, w1, b1, w2, b2, wh, o_ref = args
        x = x_ref[...] * s_ref[...]
    else:
        x_ref, w1, b1, w2, b2, wh, o_ref = args
        x = x_ref[...]
    x = _res_apply(x, w1, b1, w2, b2, n_layers)
    o_ref[...] = _dot(x, wh[...])


def _trip_update_kernel(xe_ref, xs_ref, m_ref,
                        bw1, bb1, bw2, bb2, aw1, ab1, aw2, ab2,
                        o_ref, *, n_before, n_after):
    x = (xe_ref[...] + xs_ref[...]) * INV_SQRT2
    x = _res_apply(x, bw1, bb1, bw2, bb2, n_before)
    x = (m_ref[...] + x) * INV_SQRT2
    x = _res_apply(x, aw1, ab1, aw2, ab2, n_after)
    o_ref[...] = x


def _atom_update_kernel(h_ref, sr_ref, lr_ref, w1, b1, w2, b2, o_ref, *, n_layers):
    x = (h_ref[...] + sr_ref[...] + lr_ref[...]) * INV_SQRT3
    o_ref[...] = _res_apply(x, w1, b1, w2, b2, n_layers)


def _concat_update_kernel(hs_ref, ht_ref, m_ref, ws, wt, wm, b_ref,
                          cw1, cb1, cw2, cb2, o_ref, *, n_layers):
    m2 = m_ref[...]
    y = _dot(hs_ref[...], ws[...]) + _dot(ht_ref[...], wt[...]) + _dot(m2, wm[...])
    y = _silu(y + b_ref[...])
    y = _res_apply(y, cw1, cb1, cw2, cb2, n_layers)
    o_ref[...] = (m2 + y) * INV_SQRT2


def _rbf_proj_kernel(d_ref, off_ref, wp_ref, o_ref, *, cutoff, gamma, p):
    d = d_ref[...]                              # (tm, 1)
    ds = d / cutoff
    a = -(p + 1.0) * (p + 2.0) / 2.0
    bcoef = p * (p + 2.0)
    c = -p * (p + 1.0) / 2.0
    env = 1.0 + a * ds ** p + bcoef * ds ** (p + 1) + c * ds ** (p + 2)
    env = jnp.where(ds < 1.0, env, 0.0)
    rbf = env * jnp.exp(-gamma * (ds - off_ref[...]) ** 2)
    o_ref[...] = _dot(rbf, wp_ref[...])


def _segsum_kernel(*args, seg_tile, has_scale, has_fin, fin_act):
    it = iter(args)
    idx_ref = next(it)
    v_ref = next(it)
    s_ref = next(it) if has_scale else None
    wf_ref = next(it) if has_fin else None
    bf_ref = next(it) if has_fin else None
    o_ref = next(it)
    acc_ref = next(it) if has_fin else o_ref   # no finalize -> accumulate in output

    r = pl.program_id(1)

    @pl.when(r == 0)
    def _():
        acc_ref[...] = jnp.zeros_like(acc_ref)

    seg0 = pl.program_id(0) * seg_tile
    idx = idx_ref[...]                                             # (1, tm) int32
    sel = ((idx - seg0) ==
           lax.broadcasted_iota(jnp.int32, (seg_tile, idx.shape[1]), 0))
    v = v_ref[...]
    if has_scale:
        v = v * s_ref[...]
    # 0/1 selector and values kept f32: exact scatter-add with f32 accumulation.
    acc_ref[...] += jnp.dot(sel.astype(jnp.float32), v,
                            preferred_element_type=jnp.float32)

    if has_fin:
        @pl.when(r == pl.num_programs(1) - 1)
        def _():
            y = _dot(acc_ref[...], wf_ref[...]) + bf_ref[...]
            if fin_act == "silu":
                y = _silu(y)
            o_ref[...] = y


def _ewald_block_kernel(pos_ref, mask_ref, h_ref, kT_ref, kf_ref,
                        wd_ref, wu_ref, bu_ref, o_ref):
    # one molecule per grid step: structure factors + back-projection + up-proj
    dot = jnp.dot(pos_ref[...], kT_ref[...], preferred_element_type=jnp.float32)
    c = jnp.cos(dot)                                              # (A, K)
    s = jnp.sin(dot)
    hk = _dot(h_ref[...], wd_ref[...]) * mask_ref[...]            # (A, dp), pad rows zeroed
    dn = (((0,), (0,)), ((), ()))                                 # contract over atoms
    sf_re = lax.dot_general(c.astype(jnp.bfloat16), hk.astype(jnp.bfloat16), dn,
                            preferred_element_type=jnp.float32)   # (K, dp)
    sf_im = lax.dot_general(s.astype(jnp.bfloat16), hk.astype(jnp.bfloat16), dn,
                            preferred_element_type=jnp.float32)
    kf = kf_ref[...]
    sf_re = sf_re * kf
    sf_im = sf_im * kf
    msg = _dot(c, sf_re) + _dot(s, sf_im)                         # (A, dp)
    y = _dot(msg, wu_ref[...]) + bu_ref[...]
    o_ref[...] = _silu(y)


# ----------------------------------------------------------------------------
# Wrappers
# ----------------------------------------------------------------------------
def dense(x, w, b=None, act=None):
    n = int(w.shape[1])
    b = jnp.zeros((1, n), jnp.float32) if b is None else jnp.asarray(b, jnp.float32).reshape(1, n)
    return _rowwise(functools.partial(_dense_kernel, act=act), [x], [w, b], n)


def dense2_scale(x, s, w1, b1, w2, b2, act1=None, act2=None):
    d1, d2 = int(w1.shape[1]), int(w2.shape[1])
    b1 = jnp.zeros((1, d1), jnp.float32) if b1 is None else jnp.asarray(b1, jnp.float32).reshape(1, d1)
    b2 = jnp.zeros((1, d2), jnp.float32) if b2 is None else jnp.asarray(b2, jnp.float32).reshape(1, d2)
    return _rowwise(functools.partial(_dense2_scale_kernel, act1=act1, act2=act2),
                    [x, s], [w1, b1, w2, b2], d2)


def edge_embedding(h_s, h_t, rbf_emb, w_s, w_t, b):
    ee = int(w_s.shape[1])
    return _rowwise(_edge_emb_kernel, [h_s, h_t, rbf_emb],
                    [w_s, w_t, jnp.asarray(b, jnp.float32).reshape(1, ee)], ee)


def _stack_or_dummy(stack, d):
    L = int(stack["W1"].shape[0])
    if L == 0:
        zw = jnp.zeros((1, d, d), jnp.float32)
        zb = jnp.zeros((1, 1, d), jnp.float32)
        return zw, zb, zw, zb, 0
    return stack["W1"], stack["b1"], stack["W2"], stack["b2"], L


def res_head(x, stack, w_head, prescale=None):
    d = int(x.shape[1])
    W1, b1, W2, b2, L = _stack_or_dummy(stack, d)
    bcast = [W1, b1, W2, b2, w_head]
    if prescale is None:
        return _rowwise(functools.partial(_res_head_kernel, n_layers=L, has_scale=False),
                        [x], bcast, int(w_head.shape[1]))
    return _rowwise(functools.partial(_res_head_kernel, n_layers=L, has_scale=True),
                    [x, prescale], bcast, int(w_head.shape[1]))


def trip_update(x_e, x_sw, m, before, after):
    d = int(m.shape[1])
    bW1, bb1, bW2, bb2, Lb = _stack_or_dummy(before, d)
    aW1, ab1, aW2, ab2, La = _stack_or_dummy(after, d)
    return _rowwise(functools.partial(_trip_update_kernel, n_before=Lb, n_after=La),
                    [x_e, x_sw, m], [bW1, bb1, bW2, bb2, aW1, ab1, aW2, ab2], d)


def atom_update(h, h_sr, h_lr, stack):
    d = int(h.shape[1])
    W1, b1, W2, b2, L = _stack_or_dummy(stack, d)
    return _rowwise(functools.partial(_atom_update_kernel, n_layers=L),
                    [h, h_sr, h_lr], [W1, b1, W2, b2], d)


def concat_update(h_s, h_t, m2, w_s, w_t, w_m, b, stack):
    d = int(m2.shape[1])
    W1, b1, W2, b2, L = _stack_or_dummy(stack, d)
    return _rowwise(functools.partial(_concat_update_kernel, n_layers=L),
                    [h_s, h_t, m2],
                    [w_s, w_t, w_m, jnp.asarray(b, jnp.float32).reshape(1, d),
                     W1, b1, W2, b2], d)


def radial_basis_proj(D, offsets, w_pack, cutoff, gamma, p=5):
    P = int(w_pack.shape[1])
    return _rowwise(functools.partial(_rbf_proj_kernel, cutoff=cutoff, gamma=gamma, p=p),
                    [jnp.asarray(D, jnp.float32).reshape(-1, 1)],
                    [jnp.asarray(offsets, jnp.float32).reshape(1, -1), w_pack], P)


def segment_sum(values, idx, num_segments, scale=None, finalize=None, fin_act=None):
    """Banded scatter-add.  Grid = (segment bands [parallel], row tiles [arbitrary]).
    Selector / VMEM cost is capped at SEG_TILE x SEG_ROW_TILE; optional dense(+act)
    finalize fused at the last row step.  Padded rows must carry idx == -1."""
    values = jnp.asarray(values, jnp.float32)
    M, F = values.shape
    Mp = _round_up(max(M, 1), 8)
    if Mp > SEG_ROW_TILE:
        Mp = _round_up(M, SEG_ROW_TILE)
        tm = SEG_ROW_TILE
    else:
        tm = Mp
    vp = _pad_rows(values, Mp)
    idx_row = _pad_rows(jnp.asarray(idx, jnp.int32).reshape(-1), Mp, value=-1).reshape(1, Mp)

    Sp = _round_up(max(int(num_segments), 1), 8)
    if Sp > SEG_TILE:
        Sp = _round_up(int(num_segments), SEG_TILE)
        ts = SEG_TILE
    else:
        ts = Sp

    has_scale = scale is not None
    has_fin = finalize is not None
    args = [idx_row, vp]
    in_specs = [pl.BlockSpec((1, tm), lambda s, r: (0, r)),
                pl.BlockSpec((tm, F), lambda s, r: (r, 0))]
    if has_scale:
        args.append(_pad_rows(jnp.asarray(scale, jnp.float32), Mp))
        in_specs.append(pl.BlockSpec((tm, F), lambda s, r: (r, 0)))
    scratch = []
    Fo = F
    if has_fin:
        wf, bf = finalize
        Fo = int(wf.shape[1])
        args += [jnp.asarray(wf, jnp.float32), jnp.asarray(bf, jnp.float32).reshape(1, Fo)]
        in_specs += [pl.BlockSpec((F, Fo), lambda s, r: (0, 0)),
                     pl.BlockSpec((1, Fo), lambda s, r: (0, 0))]
        scratch = [pltpu.VMEM((ts, F), jnp.float32)]

    out = pl.pallas_call(
        functools.partial(_segsum_kernel, seg_tile=ts, has_scale=has_scale,
                          has_fin=has_fin, fin_act=fin_act),
        out_shape=jax.ShapeDtypeStruct((Sp, Fo), jnp.float32),
        grid=(Sp // ts, Mp // tm),
        in_specs=in_specs,
        out_specs=pl.BlockSpec((ts, Fo), lambda s, r: (s, 0)),
        scratch_shapes=scratch,
        compiler_params=pltpu.CompilerParams(
            dimension_semantics=("parallel", "arbitrary")),
    )(*args)
    return out[:int(num_segments)]


def ewald_block(pos_mol, mask_mol, h_mol, kT, kfilter, w_down, w_up, b_up):
    """Fused per-molecule Ewald block (de-replicated): grid over molecules."""
    B, A, ea = h_mol.shape
    K = int(kT.shape[1])
    dp = int(kfilter.shape[1])
    return pl.pallas_call(
        _ewald_block_kernel,
        out_shape=jax.ShapeDtypeStruct((B, A, ea), jnp.float32),
        grid=(B,),
        in_specs=[
            pl.BlockSpec((None, A, 3), lambda b: (b, 0, 0)),
            pl.BlockSpec((None, A, 1), lambda b: (b, 0, 0)),
            pl.BlockSpec((None, A, ea), lambda b: (b, 0, 0)),
            pl.BlockSpec((3, K), lambda b: (0, 0)),
            pl.BlockSpec((K, dp), lambda b: (0, 0)),
            pl.BlockSpec((ea, dp), lambda b: (0, 0)),
            pl.BlockSpec((dp, ea), lambda b: (0, 0)),
            pl.BlockSpec((1, ea), lambda b: (0, 0)),
        ],
        out_specs=pl.BlockSpec((None, A, ea), lambda b: (b, 0, 0)),
        compiler_params=pltpu.CompilerParams(dimension_semantics=("parallel",)),
    )(jnp.asarray(pos_mol, jnp.float32), jnp.asarray(mask_mol, jnp.float32),
      jnp.asarray(h_mol, jnp.float32), jnp.asarray(kT, jnp.float32),
      jnp.asarray(kfilter, jnp.float32), jnp.asarray(w_down, jnp.float32),
      jnp.asarray(w_up, jnp.float32),
      jnp.asarray(b_up, jnp.float32).reshape(1, ea))


# ----------------------------------------------------------------------------
# Model blocks
# ----------------------------------------------------------------------------
def output_block(p, m, rbf_out_scale, idx_t_sc, num_atoms_p):
    # atom aggregation, rbf_out scaling and W_atom_in dense fused into the scatter
    x_E = segment_sum(m, idx_t_sc, num_atoms_p, scale=rbf_out_scale,
                      finalize=(p["W_atom_in"], p["b_atom_in"]), fin_act="silu")  # (Np, ea)
    W_E = jnp.pad(p["W_E"], ((0, 0), (0, HEAD_PAD - 1)))   # lane-pad the 1-wide heads
    W_F = jnp.pad(p["W_F"], ((0, 0), (0, HEAD_PAD - 1)))
    E = res_head(x_E, p["atom_res"], W_E)                                   # (Np, 8)
    F = res_head(m, p["edge_res"], W_F, prescale=rbf_out_scale)             # (Ep, 8)
    return E, F


def interaction_block(p, h, m, rbf3_scale, rbf_h_scale, cbf_scale,
                      id_swap_g, id3_ba_g, id3_ca_sc,
                      idx_s_g, idx_t_g, idx_t_sc,
                      mol_slot, mol_mask, atom_slot, pos_mol,
                      kT, kfilter, num_atoms_p, B):
    Ep = m.shape[0]
    ea = h.shape[1]

    # --- short-range triplet message passing (fused dense -> *rbf3 -> dense) ---
    # TODO(synk): exact EfficientInteractionBilinear is replaced by an
    # equivalent-shaped gather * cbf-scale * segment-sum formulation.
    x = dense2_scale(m, rbf3_scale, p["W_ba"], p["b_ba"],
                     p["W_down_trip"], p["b_down_trip"], act1="silu", act2="silu")
    x_ba = x[id3_ba_g]                                        # (Tp, et) gather (glue)
    x_e = segment_sum(x_ba, id3_ca_sc, Ep, scale=cbf_scale,
                      finalize=(p["W_up"], p["b_up"]), fin_act="silu")       # (Ep, ee)
    x_sw = x_e[id_swap_g]                                     # gather (glue)
    m2 = trip_update(x_e, x_sw, m, p["before_skip"], p["after_skip"])        # (Ep, ee)

    # --- atom update (edge -> atom aggregation, dense fused into the scatter) ---
    h_sr = segment_sum(m2, idx_t_sc, num_atoms_p, scale=rbf_h_scale,
                       finalize=(p["W_atom_agg"], p["b_atom_agg"]), fin_act="silu")

    # --- Ewald long-range block: one fused kernel per molecule (no B x dp blowup) ---
    h_mol = h[mol_slot]                                       # (B, A, ea) gather (glue)
    h_lr_mol = ewald_block(pos_mol, mol_mask, h_mol, kT, kfilter,
                           p["W_h_down"], p["W_ewald_up"], p["b_ewald_up"])
    h_lr = h_lr_mol.reshape(-1, ea)[atom_slot]                # (Np, ea) gather back (glue)

    h_new = atom_update(h, h_sr, h_lr, p["atom_res"])

    # --- edge update with new atom embeddings (concat eliminated, fused) ---
    m_out = concat_update(h_new[idx_s_g], h_new[idx_t_g], m2,
                          p["W_concat_s"], p["W_concat_t"], p["W_concat_m"],
                          p["b_concat"], p["concat_res"])
    return h_new, m_out


def forward(params, cfg, pos, z, batch, idx_s, idx_t, id_swap, id3_ba, id3_ca,
            k_grid, k_rbf_values, batch_size):
    N = int(z.shape[0])
    E = int(idx_s.shape[0])
    T = int(id3_ba.shape[0])
    nb = cfg["num_blocks"]
    ea, ee, et = cfg["emb_atom"], cfg["emb_edge"], cfg["emb_trip"]
    ec, ns = cfg["emb_cbf"], cfg["num_spherical"]
    dp = cfg["downprojection_size"]
    B = int(batch_size)

    # ---- pad every row space ONCE (glue) -----------------------------------
    Np, Ep, Tp = _round_up(N, 8), _round_up(E, 8), _round_up(T, 8)
    pos_p = _pad_rows(pos.astype(jnp.float32), Np)
    z_p = _pad_rows(z.astype(jnp.int32), Np)
    batch_p = _pad_rows(batch.astype(jnp.int32), Np, value=-1)   # -1 => ignored in scatters
    idx_s_g = _pad_rows(idx_s.astype(jnp.int32), Ep)             # gather-safe padding (0)
    idx_t_g = _pad_rows(idx_t.astype(jnp.int32), Ep)
    idx_t_sc = _pad_rows(idx_t.astype(jnp.int32), Ep, value=-1)  # scatter padding (-1)
    id_swap_g = _pad_rows(id_swap.astype(jnp.int32), Ep)
    id3_ba_g = _pad_rows(id3_ba.astype(jnp.int32), Tp)
    id3_ca_g = _pad_rows(id3_ca.astype(jnp.int32), Tp)
    id3_ca_sc = _pad_rows(id3_ca.astype(jnp.int32), Tp, value=-1)

    # ---- geometry (glue) ----------------------------------------------------
    dvec = pos_p[idx_s_g] - pos_p[idx_t_g]
    D_st = jnp.linalg.norm(dvec, axis=-1)
    V_st = -dvec / jnp.maximum(D_st, 1e-12)[:, None]             # eps guard (padded rows: D=0)
    cos_cab = jnp.clip(jnp.sum(V_st[id3_ca_g] * V_st[id3_ba_g], axis=-1), -1.0, 1.0)
    angle = jnp.arccos(cos_cab)
    sph = jnp.stack([jnp.cos(l * angle) for l in range(ns)], axis=-1)   # (Tp, ns)

    # ---- pack ALL RBF-derived projections into one lane-dense matmul --------
    cols = []
    for i in range(nb + 1):   # out-block m scaling (composed rbf_out o rbf_scale)
        cols.append(params["W_rbf_out"] @ params["out"][i]["W_rbf_scale"])
    for i in range(nb):       # int-block rbf3 / rbf_h scaling (composed)
        cols.append(params["W_rbf3"] @ params["int"][i]["W_rbf3_scale"])
        cols.append(params["W_rbf_h"] @ params["int"][i]["W_rbf_h_scale"])
    cols.append(params["W_cbf_rad"])
    cols.append(params["W_edge_rbf"])     # edge-embedding rbf slab folded in too
    w_pack = jnp.concatenate(cols, axis=1)
    proj = radial_basis_proj(D_st, params["rbf_offsets"], w_pack,
                             cfg["cutoff"], cfg["gamma"])
    off = 0
    rbf_out_scales, rbf3_scales, rbf_h_scales = [], [], []
    for i in range(nb + 1):
        rbf_out_scales.append(proj[:, off:off + ee]); off += ee
    for i in range(nb):
        rbf3_scales.append(proj[:, off:off + ee]); off += ee
        rbf_h_scales.append(proj[:, off:off + ee]); off += ee
    cbf_rad = proj[:, off:off + ec]; off += ec
    rbf_emb = proj[:, off:off + ee]; off += ee

    # ---- circular basis: dense -> *rad -> packed per-block scale, one kernel -
    w_cbf_pack = jnp.concatenate([params["int"][i]["W_cbf_scale"] for i in range(nb)], axis=1)
    cbf_all = dense2_scale(sph, cbf_rad[id3_ca_g], params["W_cbf_sph"], None,
                           w_cbf_pack, None)                        # (Tp, nb*et)
    cbf_scales = [cbf_all[:, i * et:(i + 1) * et] for i in range(nb)]

    # ---- embeddings ----------------------------------------------------------
    h = params["atom_table"][z_p]                                   # (Np, ea)
    m = edge_embedding(h[idx_s_g], h[idx_t_g], rbf_emb,
                       params["W_edge_s"], params["W_edge_t"], params["b_edge_emb"])

    # ---- Ewald precomputation: per-molecule atom layout (static glue) --------
    kT = k_grid.T.astype(jnp.float32)                               # (3, K)
    kfilter = dense(k_rbf_values, params["W_down_k"])               # (K, dp)
    batch_np = np.asarray(batch).astype(np.int64)
    counts = np.bincount(batch_np, minlength=B)
    A = _round_up(max(int(counts.max()), 1), 8)
    mol_slot_np = np.zeros((B, A), np.int32)
    mol_mask_np = np.zeros((B, A, 1), np.float32)
    atom_slot_np = np.zeros((Np,), np.int32)
    for bmol in range(B):
        ids = np.nonzero(batch_np == bmol)[0]
        mol_slot_np[bmol, :len(ids)] = ids
        mol_mask_np[bmol, :len(ids), 0] = 1.0
        atom_slot_np[ids] = bmol * A + np.arange(len(ids))
    mol_slot = jnp.asarray(mol_slot_np)
    mol_mask = jnp.asarray(mol_mask_np)
    atom_slot = jnp.asarray(atom_slot_np)
    pos_mol = pos_p[mol_slot]                                       # (B, A, 3)

    # ---- blocks ---------------------------------------------------------------
    E_t, F_st = output_block(params["out"][0], m, rbf_out_scales[0], idx_t_sc, Np)
    for i in range(nb):
        h, m = interaction_block(params["int"][i], h, m,
                                 rbf3_scales[i], rbf_h_scales[i], cbf_scales[i],
                                 id_swap_g, id3_ba_g, id3_ca_sc,
                                 idx_s_g, idx_t_g, idx_t_sc,
                                 mol_slot, mol_mask, atom_slot, pos_mol,
                                 kT, kfilter, Np, B)
        E_i, F_i = output_block(params["out"][i + 1], m, rbf_out_scales[i + 1], idx_t_sc, Np)
        E_t = E_t + E_i
        F_st = F_st + F_i

    # ---- readouts --------------------------------------------------------------
    E_mol = segment_sum(E_t, batch_p, B)[:, :1]                     # (B, 1)
    V8 = jnp.pad(V_st, ((0, 0), (0, HEAD_PAD - 3)))                 # lane-padded directions
    F_t = segment_sum(F_st[:, :1] * V8, idx_t_sc, Np)[:N, :3]       # (N, 3)
    return E_mol, F_t


# ----------------------------------------------------------------------------
# Parameters (deterministic synthetic init)
# ----------------------------------------------------------------------------
def make_params(key, cfg):
    kit = iter(jax.random.split(key, 256))

    def w(din, dout):
        return jax.random.normal(next(kit), (din, dout), jnp.float32) / math.sqrt(din)

    def b(d):
        return jnp.zeros((d,), jnp.float32)

    def res(n, d):
        if n == 0:
            return dict(W1=jnp.zeros((0, d, d), jnp.float32), b1=jnp.zeros((0, 1, d), jnp.float32),
                        W2=jnp.zeros((0, d, d), jnp.float32), b2=jnp.zeros((0, 1, d), jnp.float32))
        return dict(W1=jnp.stack([w(d, d) for _ in range(n)]),
                    b1=jnp.zeros((n, 1, d), jnp.float32),
                    W2=jnp.stack([w(d, d) for _ in range(n)]),
                    b2=jnp.zeros((n, 1, d), jnp.float32))

    ea, ee, et = cfg["emb_atom"], cfg["emb_edge"], cfg["emb_trip"]
    er, ec = cfg["emb_rbf"], cfg["emb_cbf"]
    nr, ns = cfg["num_radial"], cfg["num_spherical"]
    dp = cfg["downprojection_size"]

    P = dict(
        rbf_offsets=jnp.linspace(0.0, 1.0, nr),
        atom_table=jax.random.normal(next(kit), (cfg["num_elements"], ea), jnp.float32),
        W_edge_s=w(ea, ee), W_edge_t=w(ea, ee), W_edge_rbf=w(nr, ee), b_edge_emb=b(ee),
        W_rbf3=w(nr, er), W_rbf_h=w(nr, er), W_rbf_out=w(nr, er),
        W_cbf_sph=w(ns, ec), W_cbf_rad=w(nr, ec),
        W_down_k=w(cfg["num_k_rbf"], dp),
    )
    P["out"] = []
    for _ in range(cfg["num_blocks"] + 1):
        P["out"].append(dict(
            W_rbf_scale=w(er, ee),
            W_atom_in=w(ee, ea), b_atom_in=b(ea),
            atom_res=res(cfg["num_atom"], ea),
            W_E=w(ea, 1),
            edge_res=res(cfg["num_atom"], ee),
            W_F=w(ee, 1),
        ))
    P["int"] = []
    for _ in range(cfg["num_blocks"]):
        P["int"].append(dict(
            W_ba=w(ee, ee), b_ba=b(ee),
            W_rbf3_scale=w(er, ee),
            W_down_trip=w(ee, et), b_down_trip=b(et),
            W_cbf_scale=w(ec, et),
            W_up=w(et, ee), b_up=b(ee),
            before_skip=res(cfg["num_before_skip"], ee),
            after_skip=res(cfg["num_after_skip"], ee),
            W_rbf_h_scale=w(er, ee),
            W_atom_agg=w(ee, ea), b_atom_agg=b(ea),
            atom_res=res(cfg["num_atom"], ea),
            W_h_down=w(ea, dp),
            W_ewald_up=w(dp, ea), b_ewald_up=b(ea),
            W_concat_s=w(ea, ee), W_concat_t=w(ea, ee), W_concat_m=w(ee, ee),
            b_concat=b(ee),
            concat_res=res(cfg["num_concat"], ee),
        ))
    return P


# ----------------------------------------------------------------------------
# Graph / k-grid construction (static glue in NumPy)
# ----------------------------------------------------------------------------
def build_graph(batch_np):
    N = len(batch_np)
    idx_s, idx_t = [], []
    for t in range(N):
        for s in range(N):
            if s != t and batch_np[s] == batch_np[t]:
                idx_s.append(s)
                idx_t.append(t)
    idx_s = np.array(idx_s, np.int32)
    idx_t = np.array(idx_t, np.int32)
    lookup = {(int(s), int(t)): e for e, (s, t) in enumerate(zip(idx_s, idx_t))}
    id_swap = np.array([lookup[(int(t), int(s))] for s, t in zip(idx_s, idx_t)], np.int32)
    in_edges = {a: [] for a in range(N)}
    for e, t in enumerate(idx_t):
        in_edges[int(t)].append(e)
    id3_ba, id3_ca = [], []
    for e_ca, a in enumerate(idx_t):
        for e_ba in in_edges[int(a)]:
            if e_ba != e_ca:
                id3_ba.append(e_ba)
                id3_ca.append(e_ca)
    return (idx_s, idx_t, id_swap,
            np.array(id3_ba, np.int32), np.array(id3_ca, np.int32))


def build_k_grid(k_cutoff, delta_k, num_k_rbf):
    rng = (-1, 0, 1)
    pts = np.array([[x, y, z] for x in rng for y in rng for z in rng
                    if not (x == 0 and y == 0 and z == 0)], np.float32)
    k_grid = pts * delta_k
    k_norm = np.linalg.norm(k_grid, axis=-1, keepdims=True)
    offs = np.linspace(0.0, k_cutoff, num_k_rbf, dtype=np.float32)
    gamma = float(num_k_rbf) / k_cutoff
    k_rbf = np.exp(-gamma * (k_norm - offs[None, :]) ** 2).astype(np.float32)
    return jnp.asarray(k_grid), jnp.asarray(k_rbf)


# ----------------------------------------------------------------------------
if __name__ == "__main__":
    cfg = dict(
        num_elements=10, num_radial=8, num_spherical=4,
        emb_atom=16, emb_edge=32, emb_trip=16, emb_rbf=8, emb_cbf=8,
        num_blocks=2, num_before_skip=1, num_after_skip=1, num_concat=1, num_atom=2,
        cutoff=8.0, gamma=8.0,
        k_cutoff=2.0, delta_k=0.5, num_k_rbf=8, downprojection_size=8,
    )

    key = jax.random.PRNGKey(0)
    k_pos, k_z, k_param = jax.random.split(key, 3)

    n_per_mol, batch_size = 5, 2
    N = n_per_mol * batch_size
    batch_np = np.repeat(np.arange(batch_size), n_per_mol).astype(np.int32)
    pos = jax.random.normal(k_pos, (N, 3), jnp.float32)
    z = jax.random.randint(k_z, (N,), 0, cfg["num_elements"])

    idx_s, idx_t, id_swap, id3_ba, id3_ca = build_graph(batch_np)
    k_grid, k_rbf_values = build_k_grid(cfg["k_cutoff"], cfg["delta_k"], cfg["num_k_rbf"])
    params = make_params(k_param, cfg)

    E_mol, F_t = forward(
        params, cfg, pos, z, jnp.asarray(batch_np),
        jnp.asarray(idx_s), jnp.asarray(idx_t), jnp.asarray(id_swap),
        jnp.asarray(id3_ba), jnp.asarray(id3_ca),
        k_grid, k_rbf_values, batch_size,
    )
    jax.block_until_ready((E_mol, F_t))
    assert E_mol.shape == (batch_size, 1) and F_t.shape == (N, 3)
    assert bool(jnp.all(jnp.isfinite(E_mol))) and bool(jnp.all(jnp.isfinite(F_t)))
    print("KERNEL_OK")
</pallas_src>

<mosaic_0001>
module attributes {stable_mosaic.version = 11 : i64} {
  func.func @_rbf_proj_kernel(%arg0: i32, %arg1: memref<40x1xf32, #tpu.memory_space<vmem>>, %arg2: memref<1x8xf32, #tpu.memory_space<vmem>>, %arg3: memref<8x264xf32, #tpu.memory_space<vmem>>, %arg4: memref<40x264xf32, #tpu.memory_space<vmem>>) attributes {dimension_semantics = [#tpu.dimension_semantics<parallel>], iteration_bounds = array<i64: 1>, scalar_prefetch = 0 : i64, scratch_operands = 0 : i64, tpu.core_type = #tpu.core_type<tc>, window_params = [{transform_indices = @transform_0, window_bounds = array<i64: 40, 1>}, {pipeline_mode = #tpu.pipeline_mode<synchronous>, transform_indices = @transform_1, window_bounds = array<i64: 1, 8>}, {pipeline_mode = #tpu.pipeline_mode<synchronous>, transform_indices = @transform_2, window_bounds = array<i64: 8, 264>}, {transform_indices = @transform_3, window_bounds = array<i64: 40, 264>}]} {
    %c0 = arith.constant 0 : index
    %c0_0 = arith.constant 0 : index
    %0 = vector.load %arg1[%c0, %c0_0] : memref<40x1xf32, #tpu.memory_space<vmem>>, vector<40x1xf32>
    %cst = arith.constant 8.000000e+00 : f32
    %1 = vector.broadcast %cst : f32 to vector<40x1xf32>
    %2 = arith.divf %0, %1 : vector<40x1xf32>
    %3 = arith.mulf %2, %2 : vector<40x1xf32>
    %4 = arith.mulf %3, %3 : vector<40x1xf32>
    %5 = arith.mulf %2, %4 : vector<40x1xf32>
    %cst_1 = arith.constant -2.100000e+01 : f32
    %6 = vector.broadcast %cst_1 : f32 to vector<40x1xf32>
    %7 = arith.mulf %6, %5 : vector<40x1xf32>
    %cst_2 = arith.constant 1.000000e+00 : f32
    %8 = vector.broadcast %cst_2 : f32 to vector<40x1xf32>
    %9 = arith.addf %8, %7 : vector<40x1xf32>
    %10 = arith.mulf %2, %2 : vector<40x1xf32>
    %11 = arith.mulf %10, %10 : vector<40x1xf32>
    %12 = arith.mulf %10, %11 : vector<40x1xf32>
    %cst_3 = arith.constant 3.500000e+01 : f32
    %13 = vector.broadcast %cst_3 : f32 to vector<40x1xf32>
    %14 = arith.mulf %13, %12 : vector<40x1xf32>
    %15 = arith.addf %9, %14 : vector<40x1xf32>
    %16 = arith.mulf %2, %2 : vector<40x1xf32>
    %17 = arith.mulf %2, %16 : vector<40x1xf32>
    %18 = arith.mulf %16, %16 : vector<40x1xf32>
    %19 = arith.mulf %17, %18 : vector<40x1xf32>
    %cst_4 = arith.constant -1.500000e+01 : f32
    %20 = vector.broadcast %cst_4 : f32 to vector<40x1xf32>
    %21 = arith.mulf %20, %19 : vector<40x1xf32>
    %22 = arith.addf %15, %21 : vector<40x1xf32>
    %cst_5 = arith.constant 1.000000e+00 : f32
    %23 = vector.broadcast %cst_5 : f32 to vector<40x1xf32>
    %24 = arith.cmpf olt, %2, %23 : vector<40x1xf32>
    %cst_6 = arith.constant 0.000000e+00 : f32
    %25 = vector.broadcast %cst_6 : f32 to vector<40x1xf32>
    %26 = arith.select %24, %22, %25 : vector<40x1xi1>, vector<40x1xf32>
    %c0_7 = arith.constant 0 : index
    %c0_8 = arith.constant 0 : index
    %27 = vector.load %arg2[%c0_7, %c0_8] : memref<1x8xf32, #tpu.memory_space<vmem>>, vector<1x8xf32>
    %28 = vector.broadcast %2 : vector<40x1xf32> to vector<40x8xf32>
    %29 = vector.broadcast %27 : vector<1x8xf32> to vector<40x8xf32>
    %30 = arith.subf %28, %29 : vector<40x8xf32>
    %31 = arith.mulf %30, %30 : vector<40x8xf32>
    %cst_9 = arith.constant -8.000000e+00 : f32
    %32 = vector.broadcast %cst_9 : f32 to vector<40x8xf32>
    %33 = arith.mulf %32, %31 : vector<40x8xf32>
    %34 = math.exp %33 : vector<40x8xf32>
    %35 = vector.broadcast %26 : vector<40x1xf32> to vector<40x8xf32>
    %36 = arith.mulf %35, %34 : vector<40x8xf32>
    %c0_10 = arith.constant 0 : index
    %c0_11 = arith.constant 0 : index
    %37 = vector.load %arg3[%c0_10, %c0_11] : memref<8x264xf32, #tpu.memory_space<vmem>>, vector<8x264xf32>
    %38 = arith.truncf %36 : vector<40x8xf32> to vector<40x8xbf16>
    %39 = arith.truncf %37 : vector<8x264xf32> to vector<8x264xbf16>
    %cst_12 = arith.constant dense<0.000000e+00> : vector<40x264xf32>
    %40 = tpu.matmul %38, %39, %cst_12 {dimension_numbers = #tpu.dot_dimension_numbers<[1], [0], [0], [1], [0, 0, 1, 1], [], []>} : vector<40x8xbf16>, vector<8x264xbf16>, vector<40x264xf32> -> vector<40x264xf32>
    %c0_13 = arith.constant 0 : index
    %c0_14 = arith.constant 0 : index
    %41 = vector.load %arg4[%c0_13, %c0_14] : memref<40x264xf32, #tpu.memory_space<vmem>>, vector<40x264xf32>
    tpu.vector_store %arg4[%c0_13, %c0_14], %40 {strides = array<i32>} : memref<40x264xf32, #tpu.memory_space<vmem>>, vector<40x264xf32>,
    return
  }
  func.func @transform_0(%arg0: i32) -> (i32, i32) {
    %c0_i32 = arith.constant 0 : i32
    %c0_i32_0 = arith.constant 0 : i32
    return %arg0, %c0_i32 : i32, i32
  }
  func.func @transform_1(%arg0: i32) -> (i32, i32) {
    %c0_i32 = arith.constant 0 : i32
    %c0_i32_0 = arith.constant 0 : i32
    %c0_i32_1 = arith.constant 0 : i32
    return %c0_i32, %c0_i32_0 : i32, i32
  }
  func.func @transform_2(%arg0: i32) -> (i32, i32) {
    %c0_i32 = arith.constant 0 : i32
    %c0_i32_0 = arith.constant 0 : i32
    %c0_i32_1 = arith.constant 0 : i32
    return %c0_i32, %c0_i32_0 : i32, i32
  }
  func.func @transform_3(%arg0: i32) -> (i32, i32) {
    %c0_i32 = arith.constant 0 : i32
    %c0_i32_0 = arith.constant 0 : i32
    return %arg0, %c0_i32 : i32, i32
  }
}

</mosaic_0001>

<llo_original>
// kernel: tpu_custom_call.1
$region0: #{tpu_custom_call.1}
  #allocation0 [shape = 'u32[]', space=smem, size = 0x4, offset = 0x4, fixed_abs, tag = 'smem constant byte address 0x4 - core index']
  #allocation1 [shape = 'u32[144,128]{1,0:T(1,128)}', space=vmem, size = 0x12000, scoped, tag = 'internal scratch']
  %s0 = inlined_call_operand.vmem [shape: f32[40,1], index: 0, kind: input, shape index: {}]
  %s1 = inlined_call_operand.vmem [shape: f32[1,8], index: 1, kind: input, shape index: {}]
  %s2 = inlined_call_operand.vmem [shape: f32[8,264], index: 2, kind: input, shape index: {}]
  %s3 = inlined_call_operand.hbm [shape: f32[40,264], index: 3, kind: output, shape index: {}]
  %s4 = sld [smem:[#allocation0]]
  $region22: #{tpu_custom_call.1} parent=0
    _
  %s6 = ssub.s32 1, %s4
  %s7 = scalar_select 0, %s6, %s4
  $region1: #{tpu_custom_call.1} parent=0
    #allocation2 [shape = 'u8[61440]{0}', space=vmem, size = 0xf000, scoped, tag = 'output window, operand 0, single buffered']
    #allocation3 [shape = 's32[1]{0}', space=sflag, size = 0x4, scoped, tag = 'scoped memory for tpu_custom_call.1']
    %8 = vsyncpa [#allocation3], 0
    // Predicated region
    $region2: #{tpu_custom_call.1} parent=1 // pred_check
      _
    $region3: #{tpu_custom_call.1} parent=1 // pred_check_branch
      %10 = sbr.rel (0) target = $region5
    $region4: #{tpu_custom_call.1} parent=1 // pred_region
      _
    $region5: #{tpu_custom_call.1} parent=1 // pred_fallthru
      _
    // Predicated region
    $region6: #{tpu_custom_call.1} parent=1 // pred_check
      _
    $region7: #{tpu_custom_call.1} parent=1 // pred_check_branch
      %12 = sbr.rel (0) target = $region9
    $region8: #{tpu_custom_call.1} parent=1 // pred_region
      _
    $region9: #{tpu_custom_call.1} parent=1 // pred_fallthru
      _
    // Predicated region
    $region10: #{tpu_custom_call.1} parent=1 // pred_check
      _
    $region11: #{tpu_custom_call.1} parent=1 // pred_check_branch
      %14 = sbr.rel (0) target = $region13
    $region12: #{tpu_custom_call.1} parent=1 // pred_region
      _
    $region13: #{tpu_custom_call.1} parent=1 // pred_fallthru
      _
    %v16 = vld [vmem:[%s0] sm:$0xff]
    %v17 = vld [vmem:[%s0 + $0x8] sm:$0xff]
    %v18 = vld [vmem:[%s0 + $0x10] sm:$0xff]
    %v19 = vld [vmem:[%s0 + $0x18] sm:$0xff]
    %v20 = vld [vmem:[%s0 + $0x20] sm:$0xff]
    %v21 = vrcp.pop 8.0
    %v22 = vmul.f32 %v16, %v21
    %v23 = vmul.f32 %v17, %v21
    %v24 = vmul.f32 %v18, %v21
    %v25 = vmul.f32 %v19, %v21
    %v26 = vmul.f32 %v20, %v21
    %v27 = vmul.f32 %v22, %v22
    %v28 = vmul.f32 %v23, %v23
    %v29 = vmul.f32 %v24, %v24
    %v30 = vmul.f32 %v25, %v25
    %v31 = vmul.f32 %v26, %v26
    %v32 = vmul.f32 %v27, %v27
    %v33 = vmul.f32 %v28, %v28
    %v34 = vmul.f32 %v29, %v29
    %v35 = vmul.f32 %v30, %v30
    %v36 = vmul.f32 %v31, %v31
    %v37 = vmul.f32 %v22, %v32
    %v38 = vmul.f32 %v23, %v33
    %v39 = vmul.f32 %v24, %v34
    %v40 = vmul.f32 %v25, %v35
    %v41 = vmul.f32 %v26, %v36
    %v42 = vmul.f32 %v37, -21.0
    %v43 = vmul.f32 %v38, -21.0
    %v44 = vmul.f32 %v39, -21.0
    %v45 = vmul.f32 %v40, -21.0
    %v46 = vmul.f32 %v41, -21.0
    %v47 = vadd.f32 %v42, 1.0
    %v48 = vadd.f32 %v43, 1.0
    %v49 = vadd.f32 %v44, 1.0
    %v50 = vadd.f32 %v45, 1.0
    %v51 = vadd.f32 %v46, 1.0
    %v52 = vmul.f32 %v27, %v32
    %v53 = vmul.f32 %v28, %v33
    %v54 = vmul.f32 %v29, %v34
    %v55 = vmul.f32 %v30, %v35
    %v56 = vmul.f32 %v31, %v36
    %v57 = vmul.f32 %v52, 35.0
    %v58 = vmul.f32 %v53, 35.0
    %v59 = vmul.f32 %v54, 35.0
    %v60 = vmul.f32 %v55, 35.0
    %v61 = vmul.f32 %v56, 35.0
    %v62 = vadd.f32 %v47, %v57
    %v63 = vadd.f32 %v48, %v58
    %v64 = vadd.f32 %v49, %v59
    %v65 = vadd.f32 %v50, %v60
    %v66 = vadd.f32 %v51, %v61
    %v67 = vmul.f32 %v22, %v27
    %v68 = vmul.f32 %v23, %v28
    %v69 = vmul.f32 %v24, %v29
    %v70 = vmul.f32 %v25, %v30
    %v71 = vmul.f32 %v26, %v31
    %v72 = vmul.f32 %v67, %v32
    %v73 = vmul.f32 %v68, %v33
    %v74 = vmul.f32 %v69, %v34
    %v75 = vmul.f32 %v70, %v35
    %v76 = vmul.f32 %v71, %v36
    %v77 = vmul.f32 %v72, -15.0
    %v78 = vmul.f32 %v73, -15.0
    %v79 = vmul.f32 %v74, -15.0
    %v80 = vmul.f32 %v75, -15.0
    %v81 = vmul.f32 %v76, -15.0
    %v82 = vadd.f32 %v62, %v77
    %v83 = vadd.f32 %v63, %v78
    %v84 = vadd.f32 %v64, %v79
    %v85 = vadd.f32 %v65, %v80
    %v86 = vadd.f32 %v66, %v81
    %vm87 = vcmp.lt.f32.partialorder %v22, 1.0
    %vm88 = vcmp.lt.f32.partialorder %v23, 1.0
    %vm89 = vcmp.lt.f32.partialorder %v24, 1.0
    %vm90 = vcmp.lt.f32.partialorder %v25, 1.0
    %vm91 = vcmp.lt.f32.partialorder %v26, 1.0
    %v92 = vsel %vm87, %v82, 0.0
    %v93 = vsel %vm88, %v83, 0.0
    %v94 = vsel %vm89, %v84, 0.0
    %v95 = vsel %vm90, %v85, 0.0
    %v96 = vsel %vm91, %v86, 0.0
    %v97 = vld [vmem:[%s1] sm:$0x1]
    %99 = vset.pattern.permute.xlu0 0
    %100 = vperm.xlu0 %99, %v22
    %v101 = vpop.permute.xlu0 %100
    %104 = vset.pattern.permute.xlu0 0
    %105 = vperm.xlu0 %104, %v23
    %v106 = vpop.permute.xlu0 %105
    %109 = vset.pattern.permute.xlu0 0
    %110 = vperm.xlu0 %109, %v24
    %v111 = vpop.permute.xlu0 %110
    %114 = vset.pattern.permute.xlu0 0
    %115 = vperm.xlu0 %114, %v25
    %v116 = vpop.permute.xlu0 %115
    %119 = vset.pattern.permute.xlu0 0
    %120 = vperm.xlu0 %119, %v26
    %v121 = vpop.permute.xlu0 %120
    %v124 = vlaneseq
    %v125 = vshrl.u32 %v124, 7
    %v126 = vsub.s32 0, %v125
    %v127 = vrot.slane %v97, %v126
    %v129 = vsub.f32 %v101, %v127
    %v130 = vsub.f32 %v106, %v127
    %v131 = vsub.f32 %v111, %v127
    %v132 = vsub.f32 %v116, %v127
    %v133 = vsub.f32 %v121, %v127
    %v134 = vmul.f32 %v129, %v129
    %v135 = vmul.f32 %v130, %v130
    %v136 = vmul.f32 %v131, %v131
    %v137 = vmul.f32 %v132, %v132
    %v138 = vmul.f32 %v133, %v133
    %v139 = vmul.f32 %v134, -8.0
    %v140 = vmul.f32 %v135, -8.0
    %v141 = vmul.f32 %v136, -8.0
    %v142 = vmul.f32 %v137, -8.0
    %v143 = vmul.f32 %v138, -8.0
    %v144 = vmul.f32 %v139, 1.442695
    %v145 = vpow.pop %v144
    %v146 = vmul.f32 %v140, 1.442695
    %v147 = vpow.pop %v146
    %v148 = vmul.f32 %v141, 1.442695
    %v149 = vpow.pop %v148
    %v150 = vmul.f32 %v142, 1.442695
    %v151 = vpow.pop %v150
    %v152 = vmul.f32 %v143, 1.442695
    %v153 = vpow.pop %v152
    %155 = vset.pattern.permute.xlu0 0
    %156 = vperm.xlu0 %155, %v92
    %v157 = vpop.permute.xlu0 %156
    %160 = vset.pattern.permute.xlu0 0
    %161 = vperm.xlu0 %160, %v93
    %v162 = vpop.permute.xlu0 %161
    %165 = vset.pattern.permute.xlu0 0
    %166 = vperm.xlu0 %165, %v94
    %v167 = vpop.permute.xlu0 %166
    %170 = vset.pattern.permute.xlu0 0
    %171 = vperm.xlu0 %170, %v95
    %v172 = vpop.permute.xlu0 %171
    %175 = vset.pattern.permute.xlu0 0
    %176 = vperm.xlu0 %175, %v96
    %v177 = vpop.permute.xlu0 %176
    %v179 = vmul.f32 %v157, %v145
    %v180 = vmul.f32 %v162, %v147
    %v181 = vmul.f32 %v167, %v149
    %v182 = vmul.f32 %v172, %v151
    %v183 = vmul.f32 %v177, %v153
    %v184 = vld [vmem:[%s2] sm:$0xff]
    %v185 = vld [vmem:[%s2 + $0x8] sm:$0xff]
    %v186 = vld [vmem:[%s2 + $0x10] sm:$0xff]
    %v187 = vpack.c.bf16 %v180, %v179
    %v188 = vpack.c.bf16 %v182, %v181
    %v189 = vpack.c.bf16 %v183, %v183
    %v190 = vpack.c.bf16 %v184, %v184
    %v191 = vpack.c.bf16 %v185, %v185
    %v192 = vpack.c.bf16 %v186, %v186
    %vm193 = vcmask 64512
    %v195 = vsel %vm193, %v187, 0
    %v198 = vsel %vm193, %v188, 0
    %v201 = vsel %vm193, %v189, 0
    %vm203 = vcmask 1043456
    %v205 = vsel %vm203, %v190, 0
    %v208 = vsel %vm203, %v191, 0
    %v211 = vsel %vm203, %v192, 0
    %213 = vmatprep.subr.bf16.mxu0 0
    %214 = vmatpush1.bf16.msra.mxu0 0
    %215 = vmatprep.subr.bf16.mxu0 0
    %216 = vmatpush1.bf16.msra.mxu0 0
    %217 = vmatprep.subr.bf16.mxu0 0
    %218 = vmatpush1.bf16.msra.mxu0 0
    %219 = vmatprep.subr.bf16.mxu0 0
    %220 = vmatpush1.bf16.msra.mxu0 0
    %221 = vmatprep.subr.bf16.mxu0 0
    %222 = vmatpush1.bf16.msra.mxu0 0
    %223 = vmatprep.subr.bf16.mxu0 0
    %224 = vmatpush1.bf16.msra.mxu0 0
    %225 = vmatprep.subr.bf16.mxu0 0
    %226 = vmatpush1.bf16.msra.mxu0 0
    %227 = vmatprep.subr.bf16.mxu0 %v208
    %228 = vmatpush1.bf16.msra.mxu0 %v205
    %229 = vmatprep.subr.bf16.mxu0 0
    %230 = vmatpush2.bf16.msra.mxu0 0
    %231 = vmatprep.subr.bf16.mxu0 0
    %232 = vmatpush2.bf16.msra.mxu0 0
    %233 = vmatprep.subr.bf16.mxu0 0
    %234 = vmatpush2.bf16.msra.mxu0 0
    %235 = vmatprep.subr.bf16.mxu0 0
    %236 = vmatpush2.bf16.msra.mxu0 0
    %237 = vmatprep.subr.bf16.mxu0 0
    %238 = vmatpush2.bf16.msra.mxu0 0
    %239 = vmatprep.subr.bf16.mxu0 0
    %240 = vmatpush2.bf16.msra.mxu0 0
    %241 = vmatprep.subr.bf16.mxu0 0
    %242 = vmatpush2.bf16.msra.mxu0 0
    %243 = vmatprep.subr.bf16.mxu0 0
    %244 = vmatpush2.bf16.msra.mxu0 0
    %245 = vmatprep.mubr.bf16.mxu0 0
    %246 = vmatmul.mubr.bf16.gmra.mxu0 %v195
    %v247 = vpop.f32.mrf.mxu0
    %v248 = vadd.f32 0.0, %v247
    %v249 = vpop.f32.mrf.mxu0
    %v250 = vadd.f32 0.0, %v249
    %v251 = vpop.f32.mrf.mxu0
    %v252 = vadd.f32 0.0, %v251
    %v253 = vpop.f32.mrf.mxu0
    %v254 = vadd.f32 0.0, %v253
    %255 = vmatprep.mubr.bf16.mxu0 0
    %256 = vmatmul.mubr.bf16.gmra.mxu0 %v198
    %v257 = vpop.f32.mrf.mxu0
    %v258 = vadd.f32 0.0, %v257
    %v259 = vpop.f32.mrf.mxu0
    %v260 = vadd.f32 0.0, %v259
    %v261 = vpop.f32.mrf.mxu0
    %v262 = vadd.f32 0.0, %v261
    %v263 = vpop.f32.mrf.mxu0
    %v264 = vadd.f32 0.0, %v263
    %265 = vmatprep.mubr.bf16.mxu0 0
    %266 = vmatmul.mubr.bf16.gmra.mxu0 %v201
    %v267 = vpop.f32.mrf.mxu0
    %v268 = vadd.f32 0.0, %v267
    %v269 = vpop.f32.mrf.mxu0
    %v270 = vadd.f32 0.0, %v269
    %v271 = vpop.f32.mrf.mxu0
    %v272 = vpop.f32.mrf.mxu0
    %273 = vdwg.mxu0
    %274 = vmatprep.subr.bf16.mxu0 0
    %275 = vmatpush1.bf16.msra.mxu0 0
    %276 = vmatprep.subr.bf16.mxu0 0
    %277 = vmatpush1.bf16.msra.mxu0 0
    %278 = vmatprep.subr.bf16.mxu0 0
    %279 = vmatpush1.bf16.msra.mxu0 0
    %280 = vmatprep.subr.bf16.mxu0 0
    %281 = vmatpush1.bf16.msra.mxu0 0
    %282 = vmatprep.subr.bf16.mxu0 0
    %283 = vmatpush1.bf16.msra.mxu0 0
    %284 = vmatprep.subr.bf16.mxu0 0
    %285 = vmatpush1.bf16.msra.mxu0 0
    %286 = vmatprep.subr.bf16.mxu0 0
    %287 = vmatpush1.bf16.msra.mxu0 0
    %288 = vmatprep.subr.bf16.mxu0 0
    %289 = vmatpush1.bf16.msra.mxu0 %v211
    %290 = vmatprep.subr.bf16.mxu0 0
    %291 = vmatpush2.bf16.msra.mxu0 0
    %292 = vmatprep.subr.bf16.mxu0 0
    %293 = vmatpush2.bf16.msra.mxu0 0
    %294 = vmatprep.subr.bf16.mxu0 0
    %295 = vmatpush2.bf16.msra.mxu0 0
    %296 = vmatprep.subr.bf16.mxu0 0
    %297 = vmatpush2.bf16.msra.mxu0 0
    %298 = vmatprep.subr.bf16.mxu0 0
    %299 = vmatpush2.bf16.msra.mxu0 0
    %300 = vmatprep.subr.bf16.mxu0 0
    %301 = vmatpush2.bf16.msra.mxu0 0
    %302 = vmatprep.subr.bf16.mxu0 0
    %303 = vmatpush2.bf16.msra.mxu0 0
    %304 = vmatprep.subr.bf16.mxu0 0
    %305 = vmatpush2.bf16.msra.mxu0 0
    %306 = vmatprep.mubr.bf16.mxu0 0
    %307 = vmatmul.mubr.bf16.gmra.mxu0 %v195
    %v308 = vpop.f32.mrf.mxu0
    %v309 = vadd.f32 0.0, %v308
    %v310 = vpop.f32.mrf.mxu0
    %v311 = vpop.f32.mrf.mxu0
    %v312 = vadd.f32 0.0, %v311
    %v313 = vpop.f32.mrf.mxu0
    %314 = vmatprep.mubr.bf16.mxu0 0
    %315 = vmatmul.mubr.bf16.gmra.mxu0 %v198
    %v316 = vpop.f32.mrf.mxu0
    %v317 = vadd.f32 0.0, %v316
    %v318 = vpop.f32.mrf.mxu0
    %v319 = vpop.f32.mrf.mxu0
    %v320 = vadd.f32 0.0, %v319
    %v321 = vpop.f32.mrf.mxu0
    %322 = vmatprep.mubr.bf16.mxu0 0
    %323 = vmatmul.mubr.bf16.gmra.mxu0 %v201
    %v324 = vpop.f32.mrf.mxu0
    %v325 = vadd.f32 0.0, %v324
    %v326 = vpop.f32.mrf.mxu0
    %v327 = vpop.f32.mrf.mxu0
    %v328 = vpop.f32.mrf.mxu0
    %329 = vdwg.mxu0
    %330 = vst [vmem:[#allocation2] sm:$0xff] %v248
    %331 = vst [vmem:[#allocation2 + $0x8] sm:$0xff] %v250
    %332 = vst.msk [vmem:[#allocation2 + $0x10] sm:$0xff] %vm193, %v309
    %333 = vst [vmem:[#allocation2 + $0x18] sm:$0xff] %v252
    %334 = vst [vmem:[#allocation2 + $0x20] sm:$0xff] %v254
    %335 = vst.msk [vmem:[#allocation2 + $0x28] sm:$0xff] %vm193, %v312
    %336 = vst [vmem:[#allocation2 + $0x30] sm:$0xff] %v258
    %337 = vst [vmem:[#allocation2 + $0x38] sm:$0xff] %v260
    %338 = vst.msk [vmem:[#allocation2 + $0x40] sm:$0xff] %vm193, %v317
    %339 = vst [vmem:[#allocation2 + $0x48] sm:$0xff] %v262
    %340 = vst [vmem:[#allocation2 + $0x50] sm:$0xff] %v264
    %341 = vst.msk [vmem:[#allocation2 + $0x58] sm:$0xff] %vm193, %v320
    %342 = vst [vmem:[#allocation2 + $0x60] sm:$0xff] %v268
    %343 = vst [vmem:[#allocation2 + $0x68] sm:$0xff] %v270
    %344 = vst.msk [vmem:[#allocation2 + $0x70] sm:$0xff] %vm193, %v325
    // Predicated region
    $region14: #{tpu_custom_call.1} parent=1 // pred_check
      _
    $region15: #{tpu_custom_call.1} parent=1 // pred_check_branch
      %346 = sbr.rel (0) target = $region17
    $region16: #{tpu_custom_call.1} parent=1 // pred_region
      %s348 = ssub.s32 1920, 1920
      %349 = vsyncadd [#allocation3], %s348
      %s350 = sshll.u32 [#allocation2], 4
      %s351 = int_to_ptr.vmem [resolvable:$true] %s350
      %356 = dma.vmem_to_hbm [thread:$0]  %s351, 1920, %s3, [#allocation3], 384, 384, 24
    $region17: #{tpu_custom_call.1} parent=1 // pred_fallthru
      _
    // Predicated region
    $region18: #{tpu_custom_call.1} parent=1 // pred_check
      _
    $region19: #{tpu_custom_call.1} parent=1 // pred_check_branch
      %358 = sbr.rel (0) target = $region21
    $region20: #{tpu_custom_call.1} parent=1 // pred_region
      %359 = dma.done [#allocation3], 1920
    $region21: #{tpu_custom_call.1} parent=1 // pred_fallthru
      _
    %360 = vsyncpa [#allocation3], 1

</llo_original>
